<compile_context>
chip_gen: v7x
topology: tpu7x:2x2x1
jax: 0.10.0
libtpu: 0.0.40
codegen_flags: <defaults>
</compile_context>

<pallas_src>
import functools

import jax
import jax.numpy as jnp
import numpy as np
from jax import lax
from jax.experimental import pallas as pl
from jax.experimental.pallas import tpu as pltpu


# --------------------------------------------------------------------------- #
# Kernel body
# --------------------------------------------------------------------------- #
def _matchshifted_kernel(left_ref, right_ref, out_ref, *, W, shift):
    # left_ref / right_ref blocks: (b_blk, c_blk, hw_blk)
    # out_ref block:               (b_blk, 2, c_blk, hw_blk)
    left = left_ref[...]
    right = right_ref[...]
    b_blk, c_blk, hw_blk = left.shape
    half = (b_blk, 1, c_blk, hw_blk)

    if shift == 0:
        # No masking / rolling needed: both halves are straight copies.
        out_ref[:, 0:1, :, :] = left.reshape(half)
        out_ref[:, 1:2, :, :] = right.reshape(half)
        return

    # Keep-mask varies only along the flattened H*W lane axis; blocks start at
    # multiples of W, so local index % W == w.  Minimal iota + broadcasting.
    col = lax.broadcasted_iota(jnp.int32, (1, 1, hw_blk), 2)
    keep = (col % W) >= shift
    zero = jnp.zeros((), left.dtype)

    # Left half: zero the first `shift` columns of each row.
    out_ref[:, 0:1, :, :] = jnp.where(keep, left, zero).reshape(half)

    # Right half: shift by `shift` toward higher w.  On the flattened axis this
    # is one lane rotate; wrapped lanes land only where (w % W) < shift, which
    # the mask zeroes out.
    eff = shift % hw_blk  # eff == 0 covers shift == 0 and shift == W == hw_blk
    rolled = right if eff == 0 else pltpu.roll(right, eff, axis=2)
    out_ref[:, 1:2, :, :] = jnp.where(keep, rolled, zero).reshape(half)


# --------------------------------------------------------------------------- #
# Block / VMEM selection helpers
# --------------------------------------------------------------------------- #
def _vmem_budget_bytes():
    """Generation-aware scoped-VMEM budget (with headroom)."""
    cap = 64 << 20  # conservative fallback: v7x per-TensorCore VMEM
    try:
        info = pltpu.get_tpu_info()
        cap = int(getattr(info, "vmem_capacity_bytes", cap))
    except Exception:
        pass
    # Keep 25% headroom for compiler-internal scratch; never exceed 96 MiB.
    return min((cap * 3) // 4, 96 << 20)


def _hw_candidates(H, W):
    """Lane-dense flattened-HW block sizes (whole rows, multiples of 128)."""
    cands = {H * W}  # full extent (caller guarantees H*W % 128 == 0 here)
    for h in range(1, H):
        if H % h == 0 and (h * W) % 128 == 0:
            cands.add(h * W)
    return sorted(cands)


def _choose_blocks(B, C, hw_cands, dsize, target_bytes):
    """Pick (b_blk, c_blk, hw_blk).

    Priority inside the byte budget: full contiguous HW extent first (dense DMA
    slabs), then channels (dtype-aware sublane multiple), then batch.
    """
    sub = 8 * max(1, 4 // dsize)  # f32:8, bf16:16, int8/fp8:32
    c_cands = [c for c in range(1, C + 1) if C % c == 0 and (c % sub == 0 or c == C)]
    b_cands = [b for b in range(1, B + 1) if B % b == 0]

    combos = [(b, c, hw) for hw in hw_cands for c in c_cands for b in b_cands]
    fits = [t for t in combos if t[0] * t[1] * t[2] * dsize <= target_bytes]
    if fits:
        return max(fits, key=lambda t: (t[2], t[1], t[0]))
    # Graceful degradation for degenerate shapes: smallest footprint,
    # preferring the longest contiguous run.
    return min(combos, key=lambda t: (t[0] * t[1] * t[2], -t[2]))


# --------------------------------------------------------------------------- #
# Public wrapper
# --------------------------------------------------------------------------- #
def matchshifted(left, right, shift: int, *, target_block_bytes: int | None = None):
    """Pallas implementation of the matchshifted forward pass.

    left, right: (B, C, H, W) arrays of the same shape/dtype.
    shift: static Python int (it defines static index lists in PyTorch too).
    Returns: (B, 2C, 1, H, W)
    """
    assert left.shape == right.shape and left.dtype == right.dtype
    B, C, H, W = left.shape
    shift = int(shift)
    assert 0 <= shift <= W

    dsize = jnp.dtype(left.dtype).itemsize
    HW = H * W
    pad = (-HW) % 128          # lane padding if H*W is not a multiple of 128
    HW_p = HW + pad

    budget = _vmem_budget_bytes()
    if target_block_bytes is None:
        # ~4 MiB on v7x (64 MiB VMEM), ~8 MiB on v5e/v6e (128 MiB VMEM).
        target_block_bytes = max(2 << 20, min(8 << 20, budget // 12))

    hw_cands = [HW_p] if pad else _hw_candidates(H, W)
    b_blk, c_blk, hw_blk = _choose_blocks(B, C, hw_cands, dsize, target_block_bytes)
    block_bytes = b_blk * c_blk * hw_blk * dsize

    # Footprint ≈ 2 inputs * 2 bufs + 1 output (2x size) * 2 bufs = 8x block.
    vmem_limit = int(min(max(12 * block_bytes, 32 << 20), budget))
    vmem_limit = int(max(vmem_limit, 9 * block_bytes))  # degenerate-shape guard

    # Free contiguous views: collapse (H, W) -> H*W so the lane axis is wide.
    left3 = left.reshape(B, C, HW)
    right3 = right.reshape(B, C, HW)
    if pad:
        pw = ((0, 0), (0, 0), (0, pad))
        left3 = jnp.pad(left3, pw)
        right3 = jnp.pad(right3, pw)

    grid = (B // b_blk, C // c_blk, HW_p // hw_blk)
    kernel = functools.partial(_matchshifted_kernel, W=W, shift=shift)

    out = pl.pallas_call(
        kernel,
        out_shape=jax.ShapeDtypeStruct((B, 2, C, HW_p), left.dtype),
        grid_spec=pltpu.PrefetchScalarGridSpec(
            num_scalar_prefetch=0,
            grid=grid,
            in_specs=[
                pl.BlockSpec((b_blk, c_blk, hw_blk), lambda b, c, s: (b, c, s)),
                pl.BlockSpec((b_blk, c_blk, hw_blk), lambda b, c, s: (b, c, s)),
            ],
            out_specs=pl.BlockSpec(
                (b_blk, 2, c_blk, hw_blk), lambda b, c, s: (b, 0, c, s)),
        ),
        compiler_params=pltpu.CompilerParams(
            dimension_semantics=("parallel", "parallel", "parallel"),
            vmem_limit_bytes=vmem_limit,
        ),
        cost_estimate=pl.CostEstimate(
            flops=0,
            transcendentals=0,
            bytes_accessed=4 * B * C * HW_p * dsize,  # read L+R, write 2C out
        ),
    )(left3, right3)

    if pad:
        out = out[..., :HW]
    # (B, 2, C, HW) -> (B, 2C, 1, H, W): contiguous view == torch.cat + .view.
    return out.reshape(B, 2 * C, 1, H, W)


# --------------------------------------------------------------------------- #
# Reference + tests
# --------------------------------------------------------------------------- #
def _reference(left, right, shift):
    B, C, H, W = left.shape
    sl = np.array(left, dtype=np.float32)
    sr = np.array(right, dtype=np.float32)
    shifted_left = sl.copy()
    shifted_left[..., :shift] = 0.0
    shifted_right = np.zeros_like(sr)
    if shift < W:
        shifted_right[..., shift:] = sr[..., : W - shift]
    out = np.concatenate([shifted_left, shifted_right], axis=1)
    return out.reshape(B, 2 * C, 1, H, W)


if __name__ == "__main__":
    key = jax.random.PRNGKey(0)
    k1, k2, k3, k4 = jax.random.split(key, 4)

    # Main shape (f32): B=2, C=4, H=16, W=16.
    B, C, H, W = 2, 4, 16, 16
    left = jax.random.normal(k1, (B, C, H, W), dtype=jnp.float32)
    right = jax.random.normal(k2, (B, C, H, W), dtype=jnp.float32)

    cases = [
        (3, {}),                             # default blocks -> whole tensor, grid=(1,1,1)
        (3, {"target_block_bytes": 2048}),   # force tiling: grid=(2,1,2)
        (0, {}),                             # no-shift edge case
        (W, {}),                             # full-shift edge case (all zeros)
    ]
    for shift, kwargs in cases:
        out = jax.block_until_ready(matchshifted(left, right, shift, **kwargs))
        np.testing.assert_allclose(
            np.asarray(out, dtype=np.float32), _reference(left, right, shift),
            rtol=1e-6, atol=1e-6)
        assert out.shape == (B, 2 * C, 1, H, W)

    # Non-lane-dense spatial size (H*W=120) exercises the pad/slice path.
    Bp, Cp, Hp, Wp = 2, 4, 10, 12
    lp = jax.random.normal(k3, (Bp, Cp, Hp, Wp), dtype=jnp.float32)
    rp = jax.random.normal(k4, (Bp, Cp, Hp, Wp), dtype=jnp.float32)
    outp = jax.block_until_ready(matchshifted(lp, rp, 5))
    np.testing.assert_allclose(
        np.asarray(outp, dtype=np.float32), _reference(lp, rp, 5),
        rtol=1e-6, atol=1e-6)
    assert outp.shape == (Bp, 2 * Cp, 1, Hp, Wp)

    # bf16 exercises the dtype-aware sublane multiple (c_blk % 16).
    Bb, Cb, Hb, Wb = 2, 16, 16, 16
    lb = jax.random.normal(k1, (Bb, Cb, Hb, Wb), dtype=jnp.bfloat16)
    rb = jax.random.normal(k2, (Bb, Cb, Hb, Wb), dtype=jnp.bfloat16)
    outb = jax.block_until_ready(matchshifted(lb, rb, 4))
    np.testing.assert_allclose(
        np.asarray(outb, dtype=np.float32), _reference(lb, rb, 4),
        rtol=0, atol=0)  # pure select/shift: exact even in bf16
    assert outb.shape == (Bb, 2 * Cb, 1, Hb, Wb)

    print("KERNEL_OK")
</pallas_src>

<mosaic_0001>
module attributes {stable_mosaic.version = 11 : i64} {
  func.func @_matchshifted_kernel(%arg0: i32, %arg1: i32, %arg2: i32, %arg3: memref<2x4x256xf32, #tpu.memory_space<vmem>>, %arg4: memref<2x4x256xf32, #tpu.memory_space<vmem>>, %arg5: memref<2x2x4x256xf32, #tpu.memory_space<vmem>>) attributes {dimension_semantics = [#tpu.dimension_semantics<parallel>, #tpu.dimension_semantics<parallel>, #tpu.dimension_semantics<parallel>], iteration_bounds = array<i64: 1, 1, 1>, scalar_prefetch = 0 : i64, scratch_operands = 0 : i64, tpu.core_type = #tpu.core_type<tc>, window_params = [{transform_indices = @transform_0, window_bounds = array<i64: 2, 4, 256>}, {transform_indices = @transform_1, window_bounds = array<i64: 2, 4, 256>}, {transform_indices = @transform_2, window_bounds = array<i64: 2, 2, 4, 256>}]} {
    %c0 = arith.constant 0 : index
    %c0_0 = arith.constant 0 : index
    %c0_1 = arith.constant 0 : index
    %0 = vector.load %arg3[%c0, %c0_0, %c0_1] : memref<2x4x256xf32, #tpu.memory_space<vmem>>, vector<2x4x256xf32>
    %c0_2 = arith.constant 0 : index
    %c0_3 = arith.constant 0 : index
    %c0_4 = arith.constant 0 : index
    %1 = vector.load %arg4[%c0_2, %c0_3, %c0_4] : memref<2x4x256xf32, #tpu.memory_space<vmem>>, vector<2x4x256xf32>
    %2 = tpu.iota {dimensions = array<i32: 2>} : vector<1x1x256xi32>
    %c16_i32 = arith.constant 16 : i32
    %c0_i32 = arith.constant 0 : i32
    %3 = arith.cmpi eq, %c16_i32, %c0_i32 : i32
    %c1_i32 = arith.constant 1 : i32
    %4 = arith.select %3, %c1_i32, %c16_i32 : i32
    %5 = vector.broadcast %4 : i32 to vector<1x1x256xi32>
    %6 = arith.remsi %2, %5 : vector<1x1x256xi32>
    %c0_i32_5 = arith.constant 0 : i32
    %7 = vector.broadcast %c0_i32_5 : i32 to vector<1x1x256xi32>
    %8 = arith.cmpi ne, %6, %7 : vector<1x1x256xi32>
    %c0_i32_6 = arith.constant 0 : i32
    %9 = vector.broadcast %c0_i32_6 : i32 to vector<1x1x256xi32>
    %10 = arith.cmpi slt, %6, %9 : vector<1x1x256xi32>
    %c0_i32_7 = arith.constant 0 : i32
    %11 = arith.cmpi slt, %4, %c0_i32_7 : i32
    %12 = vector.broadcast %11 : i1 to vector<1x1x256xi1>
    %13 = vector.broadcast %12 : vector<1x1x256xi1> to vector<1x1x256xi1>
    %14 = arith.xori %10, %13 : vector<1x1x256xi1>
    %15 = arith.andi %14, %8 : vector<1x1x256xi1>
    %16 = vector.broadcast %4 : i32 to vector<1x1x256xi32>
    %17 = arith.addi %6, %16 : vector<1x1x256xi32>
    %18 = arith.select %15, %17, %6 : vector<1x1x256xi1>, vector<1x1x256xi32>
    %c3_i32 = arith.constant 3 : i32
    %19 = vector.broadcast %c3_i32 : i32 to vector<1x1x256xi32>
    %20 = arith.cmpi sge, %18, %19 : vector<1x1x256xi32>
    %cst = arith.constant 0.000000e+00 : f32
    %21 = vector.shape_cast %20 : vector<1x1x256xi1> to vector<1x1x256xi1>
    %22 = vector.broadcast %21 : vector<1x1x256xi1> to vector<2x4x256xi1>
    %23 = vector.broadcast %cst : f32 to vector<2x4x256xf32>
    %24 = arith.select %22, %0, %23 : vector<2x4x256xi1>, vector<2x4x256xf32>
    %25 = vector.shape_cast %24 : vector<2x4x256xf32> to vector<2x1x4x256xf32>
    %c0_8 = arith.constant 0 : index
    %c0_9 = arith.constant 0 : index
    %c0_10 = arith.constant 0 : index
    %c0_11 = arith.constant 0 : index
    %26 = vector.load %arg5[%c0_8, %c0_9, %c0_10, %c0_11] : memref<2x2x4x256xf32, #tpu.memory_space<vmem>>, vector<2x1x4x256xf32>
    tpu.vector_store %arg5[%c0_8, %c0_9, %c0_10, %c0_11], %25 {strides = array<i32>} : memref<2x2x4x256xf32, #tpu.memory_space<vmem>>, vector<2x1x4x256xf32>,
    %c3_i32_12 = arith.constant 3 : i32
    %27 = tpu.dynamic_rotate %1 by %c3_i32_12 dim 2 : vector<2x4x256xf32>, i32 -> vector<2x4x256xf32>
    %cst_13 = arith.constant 0.000000e+00 : f32
    %28 = vector.shape_cast %20 : vector<1x1x256xi1> to vector<1x1x256xi1>
    %29 = vector.broadcast %28 : vector<1x1x256xi1> to vector<2x4x256xi1>
    %30 = vector.broadcast %cst_13 : f32 to vector<2x4x256xf32>
    %31 = arith.select %29, %27, %30 : vector<2x4x256xi1>, vector<2x4x256xf32>
    %32 = vector.shape_cast %31 : vector<2x4x256xf32> to vector<2x1x4x256xf32>
    %c0_14 = arith.constant 0 : index
    %c1 = arith.constant 1 : index
    %c0_15 = arith.constant 0 : index
    %c0_16 = arith.constant 0 : index
    %33 = vector.load %arg5[%c0_14, %c1, %c0_15, %c0_16] : memref<2x2x4x256xf32, #tpu.memory_space<vmem>>, vector<2x1x4x256xf32>
    tpu.vector_store %arg5[%c0_14, %c1, %c0_15, %c0_16], %32 {strides = array<i32>} : memref<2x2x4x256xf32, #tpu.memory_space<vmem>>, vector<2x1x4x256xf32>,
    return
  }
  func.func @transform_0(%arg0: i32, %arg1: i32, %arg2: i32) -> (i32, i32, i32) {
    %c0_i32 = arith.constant 0 : i32
    return %arg0, %arg1, %arg2 : i32, i32, i32
  }
  func.func @transform_1(%arg0: i32, %arg1: i32, %arg2: i32) -> (i32, i32, i32) {
    %c0_i32 = arith.constant 0 : i32
    return %arg0, %arg1, %arg2 : i32, i32, i32
  }
  func.func @transform_2(%arg0: i32, %arg1: i32, %arg2: i32) -> (i32, i32, i32, i32) {
    %c0_i32 = arith.constant 0 : i32
    %c0_i32_0 = arith.constant 0 : i32
    return %arg0, %c0_i32, %arg1, %arg2 : i32, i32, i32, i32
  }
}

</mosaic_0001>

<llo_original>
// kernel: tpu_custom_call.1
$region0: #{tpu_custom_call.1}
  #allocation0 [shape = 'u32[]', space=smem, size = 0x4, offset = 0x4, fixed_abs, tag = 'smem constant byte address 0x4 - core index']
  #allocation1 [shape = 'u32[144,128]{1,0:T(1,128)}', space=vmem, size = 0x12000, scoped, tag = 'internal scratch']
  %s0 = inlined_call_operand.hbm [shape: f32[2,4,256], index: 0, kind: input, shape index: {}]
  %s1 = inlined_call_operand.hbm [shape: f32[2,4,256], index: 1, kind: input, shape index: {}]
  %s2 = inlined_call_operand.hbm [shape: f32[2,2,4,256], index: 2, kind: output, shape index: {}]
  %s3 = sld [smem:[#allocation0]]
  $region26: #{tpu_custom_call.1} parent=0
    _
  %s5 = ssub.s32 1, %s3
  %s6 = scalar_select 0, %s5, %s3
  $region1: #{tpu_custom_call.1} parent=0
    #allocation2 [shape = 'u8[8192]{0}', space=vmem, size = 0x2000, scoped, tag = 'input window, operand 0, single buffered']
    #allocation3 [shape = 's32[1]{0}', space=sflag, size = 0x4, scoped, tag = 'scoped memory for tpu_custom_call.1']
    #allocation4 [shape = 's32[1]{0}', space=sflag, size = 0x4, scoped, tag = 'scoped memory for tpu_custom_call.1']
    #allocation5 [shape = 'u8[8192]{0}', space=vmem, size = 0x2000, scoped, tag = 'input window, operand 1, single buffered']
    #allocation6 [shape = 's32[1]{0}', space=sflag, size = 0x4, scoped, tag = 'scoped memory for tpu_custom_call.1']
    #allocation7 [shape = 'u8[16384]{0}', space=vmem, size = 0x4000, scoped, tag = 'output window, operand 0, single buffered']
    %7 = vsyncpa [#allocation3], 0
    %8 = vsyncpa [#allocation6], 0
    %9 = vsyncpa [#allocation4], 0
    // Predicated region
    $region2: #{tpu_custom_call.1} parent=1 // pred_check
      _
    $region3: #{tpu_custom_call.1} parent=1 // pred_check_branch
      %11 = sbr.rel (0) target = $region5
    $region4: #{tpu_custom_call.1} parent=1 // pred_region
      %s13 = ssub.s32 256, 256
      %14 = vsyncadd [#allocation3], %s13
      %s15 = sshll.u32 [#allocation2], 4
      %s16 = int_to_ptr.vmem [resolvable:$true] %s15
      %21 = dma.hbm_to_vmem [thread:$0]  %s0, 256, %s16, [#allocation3], 128, 128, 8
    $region5: #{tpu_custom_call.1} parent=1 // pred_fallthru
      _
    // Predicated region
    $region6: #{tpu_custom_call.1} parent=1 // pred_check
      _
    $region7: #{tpu_custom_call.1} parent=1 // pred_check_branch
      %23 = sbr.rel (0) target = $region9
    $region8: #{tpu_custom_call.1} parent=1 // pred_region
      %s25 = ssub.s32 256, 256
      %26 = vsyncadd [#allocation6], %s25
      %s27 = sshll.u32 [#allocation5], 4
      %s28 = int_to_ptr.vmem [resolvable:$true] %s27
      %33 = dma.hbm_to_vmem [thread:$0]  %s1, 256, %s28, [#allocation6], 128, 128, 8
    $region9: #{tpu_custom_call.1} parent=1 // pred_fallthru
      _
    // Predicated region
    $region10: #{tpu_custom_call.1} parent=1 // pred_check
      _
    $region11: #{tpu_custom_call.1} parent=1 // pred_check_branch
      %35 = sbr.rel (0) target = $region13
    $region12: #{tpu_custom_call.1} parent=1 // pred_region
      %36 = dma.done [#allocation3], 256
    $region13: #{tpu_custom_call.1} parent=1 // pred_fallthru
      _
    // Predicated region
    $region14: #{tpu_custom_call.1} parent=1 // pred_check
      _
    $region15: #{tpu_custom_call.1} parent=1 // pred_check_branch
      %38 = sbr.rel (0) target = $region17
    $region16: #{tpu_custom_call.1} parent=1 // pred_region
      %39 = dma.done [#allocation6], 256
    $region17: #{tpu_custom_call.1} parent=1 // pred_fallthru
      _
    %v40 = vld [vmem:[#allocation2] sm:$0xff]
    %v41 = vld [vmem:[#allocation2 + $0x8] sm:$0xff]
    %v42 = vld [vmem:[#allocation5] sm:$0xff]
    %v43 = vld [vmem:[#allocation5 + $0x8] sm:$0xff]
    %v44 = vlaneseq
    %v45 = vand.u32 %v44, 127
    %v46 = vadd.s32 %v45, 128
    %vm47 = vcmp.lt.s32.totalorder %v45, 0
    %v48 = vsub.s32 0, %v45
    %v49 = vsel %vm47, %v48, %v45
    %v50 = vshrl.u32 %v49, 4
    %v51 = vand.u32 %v49, 15
    %v52 = vsub.s32 0, %v51
    %v53 = vsel %vm47, %v52, %v51
    %vm54 = vcmp.lt.s32.totalorder %v46, 0
    %v55 = vsub.s32 0, %v46
    %v56 = vsel %vm54, %v55, %v46
    %v57 = vshrl.u32 %v56, 4
    %v58 = vand.u32 %v56, 15
    %v59 = vsub.s32 0, %v58
    %v60 = vsel %vm54, %v59, %v58
    %vm61 = vcmp.ne.s32.totalorder %v53, 0
    %vm62 = vcmp.ne.s32.totalorder %v60, 0
    %vm63 = vcmp.lt.s32.totalorder %v53, 0
    %vm64 = vcmp.lt.s32.totalorder %v60, 0
    %vm65 = vmand %vm63, %vm61
    %vm66 = vmand %vm64, %vm62
    %v67 = vadd.s32 %v53, 16
    %v68 = vadd.s32 %v60, 16
    %v69 = vsel %vm65, %v67, %v53
    %v70 = vsel %vm66, %v68, %v60
    %vm71 = vcmp.ge.s32.totalorder %v69, 3
    %vm72 = vcmp.ge.s32.totalorder %v70, 3
    %v73 = vsel %vm71, 1, 0
    %v74 = vsel %vm72, 1, 0
    %vm75 = vcmp.eq.s32.totalorder %v73, 1
    %vm76 = vcmp.eq.s32.totalorder %v74, 1
    %v79 = vcombine.high %v40, %v40
    %v80 = vcombine.high %v41, %v41
    %v83 = vsel %vm75, %v40, 0.0
    %v84 = vsel %vm76, %v79, 0.0
    %v85 = vsel %vm75, %v41, 0.0
    %v86 = vsel %vm76, %v80, 0.0
    %v91 = vcombine.low %v83, %v84
    %v92 = vcombine.low %v85, %v86
    %95 = vst [vmem:[#allocation7] sm:$0xff] %v91
    %96 = vst [vmem:[#allocation7 + $0x10] sm:$0xff] %v92
    %v99 = vcombine.high %v42, %v42
    %v100 = vcombine.high %v43, %v43
    %103 = vrot.lane.b32.xlu0 %v42, 3
    %v104 = vpop.permute.xlu0 %103
    %105 = vrot.lane.b32.xlu0 %v43, 3
    %v106 = vpop.permute.xlu0 %105
    %107 = vrot.lane.b32.xlu0 %v99, 3
    %v108 = vpop.permute.xlu0 %107
    %109 = vrot.lane.b32.xlu0 %v100, 3
    %v110 = vpop.permute.xlu0 %109
    %vm111 = vcmp.lt.s32.totalorder %v45, 3
    %v112 = vsel %vm111, %v104, %v108
    %v113 = vsel %vm111, %v106, %v110
    %v114 = vsel %vm111, %v108, %v104
    %v115 = vsel %vm111, %v110, %v106
    %v116 = vsel %vm75, %v114, 0.0
    %v117 = vsel %vm76, %v112, 0.0
    %v118 = vsel %vm75, %v115, 0.0
    %v119 = vsel %vm76, %v113, 0.0
    %v124 = vcombine.low %v116, %v117
    %v125 = vcombine.low %v118, %v119
    %s128 = scalar_lea.vmem [#allocation7], 8
    %129 = vst [vmem:[%s128] sm:$0xff] %v124
    %130 = vst [vmem:[%s128 + $0x10] sm:$0xff] %v125
    // Predicated region
    $region18: #{tpu_custom_call.1} parent=1 // pred_check
      _
    $region19: #{tpu_custom_call.1} parent=1 // pred_check_branch
      %132 = sbr.rel (0) target = $region21
    $region20: #{tpu_custom_call.1} parent=1 // pred_region
      %s134 = ssub.s32 512, 512
      %135 = vsyncadd [#allocation4], %s134
      %s136 = sshll.u32 [#allocation7], 4
      %s137 = int_to_ptr.vmem [resolvable:$true] %s136
      %142 = dma.vmem_to_hbm [thread:$0]  %s137, 512, %s2, [#allocation4], 128, 128, 8
    $region21: #{tpu_custom_call.1} parent=1 // pred_fallthru
      _
    // Predicated region
    $region22: #{tpu_custom_call.1} parent=1 // pred_check
      _
    $region23: #{tpu_custom_call.1} parent=1 // pred_check_branch
      %144 = sbr.rel (0) target = $region25
    $region24: #{tpu_custom_call.1} parent=1 // pred_region
      %145 = dma.done [#allocation4], 512
    $region25: #{tpu_custom_call.1} parent=1 // pred_fallthru
      _
    %146 = vsyncpa [#allocation3], 1
    %147 = vsyncpa [#allocation6], 1
    %148 = vsyncpa [#allocation4], 1

</llo_original>
